<compile_context>
chip_gen: v7x
topology: tpu7x:2x2x1
jax: 0.10.0
libtpu: 0.0.40
codegen_flags: <defaults>
</compile_context>

<pallas_src>
import functools
import math

import jax
import jax.numpy as jnp
from jax.experimental import pallas as pl
from jax.experimental.pallas import tpu as pltpu

EPS = 1e-5  # nn.InstanceNorm2d default eps (affine=False, track_running_stats=False)


def _cin_kernel(x_ref, gb_ref, o_ref, *, inv_hw):
    """Per-(n, c) instance norm over the spatial (lane) axis + affine + ReLU.

    x_ref : (1, C_TILE, HW_pad)  -- spatial on lanes, channels on sublanes
    gb_ref: (1, C_TILE, 2)       -- [..., 0] = gamma, [..., 1] = beta
    """
    x = x_ref[...].astype(jnp.float32)

    # One-pass stats: both cross-lane reductions issue from the same data pass.
    # Zero padding on the lane axis contributes nothing to either sum, so we
    # divide by the true spatial extent (inv_hw) rather than the padded one.
    s1 = jnp.sum(x, axis=-1, keepdims=True)          # (1, C_TILE, 1)
    s2 = jnp.sum(x * x, axis=-1, keepdims=True)      # (1, C_TILE, 1)
    mu = s1 * inv_hw
    var = jnp.maximum(s2 * inv_hw - mu * mu, 0.0)    # clamp E[x^2]-mu^2 >= 0

    gb = gb_ref[...].astype(jnp.float32)
    gamma = gb[:, :, 0:1]                            # (1, C_TILE, 1)
    beta = gb[:, :, 1:2]                             # (1, C_TILE, 1)

    # Fold gamma (and mu) into a single per-channel scale/shift: the full tile
    # then sees exactly one FMA + ReLU.
    scale = gamma * jax.lax.rsqrt(var + EPS)
    shift = beta - mu * scale
    o_ref[...] = jnp.maximum(x * scale + shift, 0.0).astype(o_ref.dtype)


def _vmem_budget():
    """Generation-aware scoped-VMEM limit and per-x-tile byte budget."""
    try:
        phys = pltpu.get_tpu_info().vmem_capacity_bytes
    except Exception:
        phys = 64 << 20  # conservative (v7x-sized) fallback
    # Leave >=16 MiB headroom under physical VMEM, cap the scoped limit at 64 MiB.
    vmem_limit = int(min(max(phys - (16 << 20), 16 << 20), 64 << 20))
    # in + out double-buffered ~= 4x tile; keep that at ~half the scoped limit.
    tile_budget = vmem_limit // 8
    return vmem_limit, tile_budget


def _pick_c_tile(C, HW_pad, bytes_per_elem, N, tile_budget_bytes, vmem_limit_bytes,
                 min_grid_steps=4):
    """Largest legal channel tile within budget, shrunk (if possible) so the
    total grid has >= min_grid_steps steps (keeps both v7x cores busy and
    enables in-core DMA/compute pipelining)."""
    # Legal tiles: multiples of 8 that divide C, plus the full C block.
    tiles = sorted({t for t in range(8, C, 8) if C % t == 0} | {C}, reverse=True)
    per_tile = lambda t: t * HW_pad * bytes_per_elem

    fitting = [t for t in tiles if per_tile(t) <= tile_budget_bytes]
    if not fitting:
        # TODO(synk): huge HW with no fitting channel tile really wants an
        # HW-tiled two-phase grid (accumulate stats, then normalize); for now
        # clamp to the smallest legal channel tile and fail loudly if even the
        # double-buffered in+out for that tile cannot fit the scoped VMEM.
        smallest = tiles[-1]
        if 4 * per_tile(smallest) > vmem_limit_bytes:
            raise ValueError(
                f"Condition_IN: no channel tile fits VMEM (C={C}, HW={HW_pad}); "
                "an HW-tiled stats pass is required for this shape.")
        fitting = [smallest]

    for t in fitting:  # descending: biggest tile that still yields enough steps
        if N * (C // t) >= min_grid_steps:
            return t
    return fitting[-1]  # small problem; grid cannot reach min_grid_steps anyway


def condition_in(x_nchw, cond, params):
    """x_nchw: (N, C, H, W), cond: (N, cond_size)."""
    wfc, bfc, wvar, bvar, wmean, bmean = params
    N, C, H, W = x_nchw.shape
    HW = H * W
    HW_pad = ((HW + 127) // 128) * 128  # lane-dense blocks for loads/stores

    # Conditioning MLP hoisted out of the per-step kernel (M=1 matmuls would
    # leave the MXU ~idle and sit on the critical path). One batched XLA matmul
    # chain over all N rows; gamma/beta merged into a single (N, C, 2) array so
    # the kernel needs only one tiny conditioning DMA per grid step.
    h = jax.nn.sigmoid(jnp.dot(cond, wfc) + bfc)                 # (N, C)
    gamma = jax.nn.sigmoid(jnp.dot(h, wvar) + bvar) * 2.0        # (N, C)
    beta = jnp.dot(h, wmean) + bmean                             # (N, C)
    gb = jnp.stack([gamma, beta], axis=-1).astype(jnp.float32)   # (N, C, 2)

    # NCHW -> (N, C, HW): contiguous reshape (free); pad lanes if HW % 128 != 0.
    x_flat = x_nchw.reshape(N, C, HW)
    if HW_pad != HW:
        x_flat = jnp.pad(x_flat, ((0, 0), (0, 0), (0, HW_pad - HW)))

    vmem_limit, tile_budget = _vmem_budget()
    c_tile = _pick_c_tile(C, HW_pad, jnp.dtype(x_nchw.dtype).itemsize, N,
                          tile_budget, vmem_limit)
    grid = (N, C // c_tile)

    kernel = functools.partial(_cin_kernel, inv_hw=1.0 / HW)

    out = pl.pallas_call(
        kernel,
        out_shape=jax.ShapeDtypeStruct((N, C, HW_pad), x_nchw.dtype),
        grid=grid,
        in_specs=[
            pl.BlockSpec((1, c_tile, HW_pad), lambda n, c: (n, c, 0)),  # x tile
            pl.BlockSpec((1, c_tile, 2), lambda n, c: (n, c, 0)),       # gamma/beta
        ],
        out_specs=pl.BlockSpec((1, c_tile, HW_pad), lambda n, c: (n, c, 0)),
        compiler_params=pltpu.CompilerParams(
            dimension_semantics=("parallel", "parallel"),
            vmem_limit_bytes=vmem_limit,
        ),
    )(x_flat, gb)

    if HW_pad != HW:
        out = out[:, :, :HW]
    return out.reshape(N, C, H, W)


def condition_in_reference(x, cond, params):
    """Pure-JAX reference mirroring the PyTorch forward exactly."""
    wfc, bfc, wvar, bvar, wmean, bmean = params
    mu = jnp.mean(x, axis=(2, 3), keepdims=True)
    var = jnp.var(x, axis=(2, 3), keepdims=True)          # biased, like InstanceNorm2d
    xn = (x - mu) / jnp.sqrt(var + EPS)
    h = jax.nn.sigmoid(jnp.dot(cond, wfc) + bfc)
    gamma = jax.nn.sigmoid(jnp.dot(h, wvar) + bvar) * 2.0
    beta = jnp.dot(h, wmean) + bmean
    return jnp.maximum(xn * gamma[:, :, None, None] + beta[:, :, None, None], 0.0)


def init_linear(key, fan_in, fan_out):
    """PyTorch nn.Linear default init; weight stored transposed as (in, out)."""
    kw, kb = jax.random.split(key)
    bound = 1.0 / math.sqrt(fan_in)
    w = jax.random.uniform(kw, (fan_in, fan_out), jnp.float32, -bound, bound)
    b = jax.random.uniform(kb, (1, fan_out), jnp.float32, -bound, bound)
    return w, b


if __name__ == "__main__":
    # Small shapes consistent with the module: x is NCHW, cond is (N, cond_size).
    N, C, H, W = 2, 32, 16, 16       # HW = 256 -> lane-dense blocks, no padding
    COND_SIZE = 8

    key = jax.random.PRNGKey(0)
    kx, kc, k_fc, k_var, k_mean = jax.random.split(key, 5)

    x = jax.random.normal(kx, (N, C, H, W), jnp.float32)
    cond = jax.random.normal(kc, (N, COND_SIZE), jnp.float32)

    wfc, bfc = init_linear(k_fc, COND_SIZE, C)     # self.fc
    wvar, bvar = init_linear(k_var, C, C)          # self.var
    wmean, bmean = init_linear(k_mean, C, C)       # self.mean
    params = (wfc, bfc, wvar, bvar, wmean, bmean)

    out = condition_in(x, cond, params)
    out = jax.block_until_ready(out)

    ref = condition_in_reference(x, cond, params)
    assert out.shape == (N, C, H, W)
    assert jnp.allclose(out, ref, rtol=1e-5, atol=1e-5), (
        f"max abs diff {jnp.max(jnp.abs(out - ref))}")

    print("KERNEL_OK")
</pallas_src>

<mosaic_0001>
module attributes {stable_mosaic.version = 11 : i64} {
  func.func @_cin_kernel(%arg0: i32, %arg1: i32, %arg2: memref<1x16x256xf32, #tpu.memory_space<vmem>>, %arg3: memref<1x16x2xf32, #tpu.memory_space<vmem>>, %arg4: memref<1x16x256xf32, #tpu.memory_space<vmem>>) attributes {dimension_semantics = [#tpu.dimension_semantics<parallel>, #tpu.dimension_semantics<parallel>], iteration_bounds = array<i64: 2, 2>, scalar_prefetch = 0 : i64, scratch_operands = 0 : i64, tpu.core_type = #tpu.core_type<tc>, window_params = [{transform_indices = @transform_0, window_bounds = array<i64: 1, 16, 256>}, {transform_indices = @transform_1, window_bounds = array<i64: 1, 16, 2>}, {transform_indices = @transform_2, window_bounds = array<i64: 1, 16, 256>}]} {
    %c0 = arith.constant 0 : index
    %c0_0 = arith.constant 0 : index
    %c0_1 = arith.constant 0 : index
    %0 = vector.load %arg2[%c0, %c0_0, %c0_1] : memref<1x16x256xf32, #tpu.memory_space<vmem>>, vector<1x16x256xf32>
    %cst = arith.constant dense<0.000000e+00> : vector<1x16xf32>
    %1 = vector.multi_reduction <add>, %0, %cst [2] : vector<1x16x256xf32> to vector<1x16xf32>
    %2 = vector.shape_cast %1 : vector<1x16xf32> to vector<1x16x1xf32>
    %3 = arith.mulf %0, %0 : vector<1x16x256xf32>
    %cst_2 = arith.constant dense<0.000000e+00> : vector<1x16xf32>
    %4 = vector.multi_reduction <add>, %3, %cst_2 [2] : vector<1x16x256xf32> to vector<1x16xf32>
    %5 = vector.shape_cast %4 : vector<1x16xf32> to vector<1x16x1xf32>
    %cst_3 = arith.constant 3.906250e-03 : f32
    %6 = vector.broadcast %cst_3 : f32 to vector<1x16x1xf32>
    %7 = arith.mulf %2, %6 : vector<1x16x1xf32>
    %cst_4 = arith.constant 3.906250e-03 : f32
    %8 = vector.broadcast %cst_4 : f32 to vector<1x16x1xf32>
    %9 = arith.mulf %5, %8 : vector<1x16x1xf32>
    %10 = arith.mulf %7, %7 : vector<1x16x1xf32>
    %11 = arith.subf %9, %10 : vector<1x16x1xf32>
    %cst_5 = arith.constant 0.000000e+00 : f32
    %12 = vector.broadcast %cst_5 : f32 to vector<1x16x1xf32>
    %13 = arith.maximumf %11, %12 : vector<1x16x1xf32>
    %c0_6 = arith.constant 0 : index
    %c0_7 = arith.constant 0 : index
    %c0_8 = arith.constant 0 : index
    %14 = vector.load %arg3[%c0_6, %c0_7, %c0_8] : memref<1x16x2xf32, #tpu.memory_space<vmem>>, vector<1x16x2xf32>
    %15 = vector.extract_strided_slice %14 {offsets = [0, 0, 0], sizes = [1, 16, 1], strides = [1, 1, 1]} : vector<1x16x2xf32> to vector<1x16x1xf32>
    %16 = vector.extract_strided_slice %14 {offsets = [0, 0, 1], sizes = [1, 16, 1], strides = [1, 1, 1]} : vector<1x16x2xf32> to vector<1x16x1xf32>
    %cst_9 = arith.constant 9.99999974E-6 : f32
    %17 = vector.broadcast %cst_9 : f32 to vector<1x16x1xf32>
    %18 = arith.addf %13, %17 : vector<1x16x1xf32>
    %19 = math.rsqrt %18 : vector<1x16x1xf32>
    %20 = arith.mulf %15, %19 : vector<1x16x1xf32>
    %21 = arith.mulf %7, %20 : vector<1x16x1xf32>
    %22 = arith.subf %16, %21 : vector<1x16x1xf32>
    %23 = vector.broadcast %20 : vector<1x16x1xf32> to vector<1x16x256xf32>
    %24 = arith.mulf %0, %23 : vector<1x16x256xf32>
    %25 = vector.broadcast %22 : vector<1x16x1xf32> to vector<1x16x256xf32>
    %26 = arith.addf %24, %25 : vector<1x16x256xf32>
    %cst_10 = arith.constant 0.000000e+00 : f32
    %27 = vector.broadcast %cst_10 : f32 to vector<1x16x256xf32>
    %28 = arith.maximumf %26, %27 : vector<1x16x256xf32>
    %c0_11 = arith.constant 0 : index
    %c0_12 = arith.constant 0 : index
    %c0_13 = arith.constant 0 : index
    %29 = vector.load %arg4[%c0_11, %c0_12, %c0_13] : memref<1x16x256xf32, #tpu.memory_space<vmem>>, vector<1x16x256xf32>
    tpu.vector_store %arg4[%c0_11, %c0_12, %c0_13], %28 {strides = array<i32>} : memref<1x16x256xf32, #tpu.memory_space<vmem>>, vector<1x16x256xf32>,
    return
  }
  func.func @transform_0(%arg0: i32, %arg1: i32) -> (i32, i32, i32) {
    %c0_i32 = arith.constant 0 : i32
    %c0_i32_0 = arith.constant 0 : i32
    return %arg0, %arg1, %c0_i32 : i32, i32, i32
  }
  func.func @transform_1(%arg0: i32, %arg1: i32) -> (i32, i32, i32) {
    %c0_i32 = arith.constant 0 : i32
    %c0_i32_0 = arith.constant 0 : i32
    return %arg0, %arg1, %c0_i32 : i32, i32, i32
  }
  func.func @transform_2(%arg0: i32, %arg1: i32) -> (i32, i32, i32) {
    %c0_i32 = arith.constant 0 : i32
    %c0_i32_0 = arith.constant 0 : i32
    return %arg0, %arg1, %c0_i32 : i32, i32, i32
  }
}

</mosaic_0001>

<llo_original>
// kernel: tpu_custom_call.1
$region0: #{tpu_custom_call.1}
  #allocation0 [shape = 'u32[]', space=smem, size = 0x4, offset = 0x4, fixed_abs, tag = 'smem constant byte address 0x4 - core index']
  #allocation1 [shape = 'u32[144,128]{1,0:T(1,128)}', space=vmem, size = 0x12000, scoped, tag = 'internal scratch']
  %s0 = inlined_call_operand.hbm [shape: f32[2,32,256], index: 0, kind: input, shape index: {}]
  %s1 = inlined_call_operand.vmem [shape: f32[2,32,2], index: 1, kind: input, shape index: {}]
  %s2 = inlined_call_operand.hbm [shape: f32[2,32,256], index: 2, kind: output, shape index: {}]
  %s3 = sld [smem:[#allocation0]]
  $region45: #{tpu_custom_call.1} parent=0
    _
  %s5 = ssub.s32 1, %s3
  %s6 = scalar_select 0, %s5, %s3
  $region1: #{tpu_custom_call.1} parent=0
    #allocation2 [shape = 'u8[32768]{0}', space=vmem, size = 0x8000, scoped, tag = 'input window, operand 0']
    #allocation3 [shape = 's32[2]{0}', space=sflag, size = 0x8, scoped, tag = 'scoped memory for tpu_custom_call.1']
    #allocation4 [shape = 's32[2]{0}', space=sflag, size = 0x8, scoped, tag = 'scoped memory for tpu_custom_call.1']
    #allocation5 [shape = 'u8[32768]{0}', space=vmem, size = 0x8000, scoped, tag = 'output window, operand 0']
    %7 = vsyncpa [#allocation3], 0
    %s8 = scalar_lea.sflag [#allocation3], 1
    %9 = vsyncpa %s8, 0
    %10 = vsyncpa [#allocation4], 0
    %s11 = scalar_lea.sflag [#allocation4], 1
    %12 = vsyncpa %s11, 0
    loop: start=0, step=1, limit=6
    $region2: #{tpu_custom_call.1} parent=1 // loop_pre_header
      _
    $region3: #{tpu_custom_call.1} parent=1 // loop_header
      %s14 = sphi 0, %s18
      %p15 = scmp.ge.s32.totalorder %s14, 6
      %s21 = sphi 0, %s33
      %s22 = sphi 0, %s29
      %s23 = sphi 0, %s21
      %s24 = sphi 0, %s22
      %s25 = sphi 0, %s23
      %s26 = sphi 0, %s24
      %s38 = sphi 0, %s40
      %s41 = sphi 0, %s38
      %s42 = sphi 0, %s41
      %s58 = sphi 0, %s42
      %s66 = sphi 0, %s68
      %s69 = sphi 0, %s66
      %s70 = sphi 0, %s69
      %s86 = sphi 0, %s70
      %s94 = sphi 0, %s96
      %s97 = sphi 0, %s94
      %s98 = sphi 0, %s97
      %s114 = sphi 0, %s98
    $region4: #{tpu_custom_call.1} parent=1 // loop_header_branch
      %17 = sbr.rel (%p15) target = $region8
    $region5: #{tpu_custom_call.1} parent=1 // loop_body
      %s19 = ssub.s32 %s14, 1
      %s20 = ssub.s32 %s14, 2
      %s27 = sadd.s32 1, %s22
      %p28 = scmp.ge.s32.totalorder %s27, 2
      %s29 = scalar_select %p28, 0, %s27
      %s30 = sadd.s32 1, %s21
      %s31 = scalar_select %p28, %s30, %s21
      %p32 = scmp.ge.s32.totalorder %s31, 2
      %s33 = scalar_select %p32, 0, %s31
      %s34 = ssub.s32 %s21, %s33
      %s35 = ssub.s32 %s22, %s29
      %s36 = sor.u32 %s34, %s35
      %p37 = scmp.eq.s32.totalorder %s36, 0
      %s39 = sadd.s32 %s38, 1
      %s40 = scalar_select %p37, %s38, %s39
      %p43 = pneg %p37
      %p44 = scmp.eq.s32.totalorder %s14, 3
      %p45 = por %p43, %p44
      %p46 = scmp.ne.s32.totalorder %s38, %s41
      %p47 = scmp.eq.s32.totalorder %s14, 0
      %p48 = por %p46, %p47
      %p49 = scmp.ne.s32.totalorder %s38, %s41
      %p50 = scmp.eq.s32.totalorder %s19, 3
      %p51 = por %p49, %p50
      %p52 = scmp.ne.s32.totalorder %s41, %s42
      %p53 = scmp.eq.s32.totalorder %s19, 0
      %p54 = por %p52, %p53
      %p55 = scmp.ne.s32.totalorder %s41, %s42
      %p56 = scmp.eq.s32.totalorder %s20, 3
      %p57 = por %p55, %p56
      %p59 = scmp.ne.s32.totalorder %s42, %s58
      %p60 = scmp.eq.s32.totalorder %s20, 0
      %p61 = por %p59, %p60
      %s62 = ssub.s32 %s21, %s33
      %s63 = ssub.s32 %s22, %s29
      %s64 = sor.u32 %s62, %s63
      %p65 = scmp.eq.s32.totalorder %s64, 0
      %s67 = sadd.s32 %s66, 1
      %s68 = scalar_select %p65, %s66, %s67
      %p71 = pneg %p65
      %p72 = scmp.eq.s32.totalorder %s14, 3
      %p73 = por %p71, %p72
      %p74 = scmp.ne.s32.totalorder %s66, %s69
      %p75 = scmp.eq.s32.totalorder %s14, 0
      %p76 = por %p74, %p75
      %p77 = scmp.ne.s32.totalorder %s66, %s69
      %p78 = scmp.eq.s32.totalorder %s19, 3
      %p79 = por %p77, %p78
      %p80 = scmp.ne.s32.totalorder %s69, %s70
      %p81 = scmp.eq.s32.totalorder %s19, 0
      %p82 = por %p80, %p81
      %p83 = scmp.ne.s32.totalorder %s69, %s70
      %p84 = scmp.eq.s32.totalorder %s20, 3
      %p85 = por %p83, %p84
      %p87 = scmp.ne.s32.totalorder %s70, %s86
      %p88 = scmp.eq.s32.totalorder %s20, 0
      %p89 = por %p87, %p88
      %s90 = ssub.s32 %s21, %s33
      %s91 = ssub.s32 %s22, %s29
      %s92 = sor.u32 %s90, %s91
      %p93 = scmp.eq.s32.totalorder %s92, 0
      %s95 = sadd.s32 %s94, 1
      %s96 = scalar_select %p93, %s94, %s95
      %p99 = pneg %p93
      %p100 = scmp.eq.s32.totalorder %s14, 3
      %p101 = por %p99, %p100
      %p102 = scmp.ne.s32.totalorder %s94, %s97
      %p103 = scmp.eq.s32.totalorder %s14, 0
      %p104 = por %p102, %p103
      %p105 = scmp.ne.s32.totalorder %s94, %s97
      %p106 = scmp.eq.s32.totalorder %s19, 3
      %p107 = por %p105, %p106
      %p108 = scmp.ne.s32.totalorder %s97, %s98
      %p109 = scmp.eq.s32.totalorder %s19, 0
      %p110 = por %p108, %p109
      %p111 = scmp.ne.s32.totalorder %s97, %s98
      %p112 = scmp.eq.s32.totalorder %s20, 3
      %p113 = por %p111, %p112
      %p115 = scmp.ne.s32.totalorder %s98, %s114
      %p116 = scmp.eq.s32.totalorder %s20, 0
      %p117 = por %p115, %p116
      %p118 = scmp.le.s32.totalorder 1, %s14
      %p119 = scmp.lt.s32.totalorder %s14, 5
      %p120 = pnand %p118, %p119
      %p121 = pneg %p120
      // Predicated region
      $region9: #{tpu_custom_call.1} parent=5 // pred_check
        _
      $region10: #{tpu_custom_call.1} parent=5 // pred_check_branch
        %123 = sbr.rel (%p120) target = $region12
      $region11: #{tpu_custom_call.1} parent=5 // pred_region
        %s124 = ssub.s32 %s14, 1
      $region12: #{tpu_custom_call.1} parent=5 // pred_fallthru
        _
      %p125 = scmp.lt.s32.totalorder %s14, 4
      // Predicated region
      $region13: #{tpu_custom_call.1} parent=5 // pred_check
        %p126 = pneg %p125
      $region14: #{tpu_custom_call.1} parent=5 // pred_check_branch
        %128 = sbr.rel (%p126) target = $region16
      $region15: #{tpu_custom_call.1} parent=5 // pred_region
        // Predicated region
        $region17: #{tpu_custom_call.1} parent=15 // pred_check
          %p129 = pneg %p48
        $region18: #{tpu_custom_call.1} parent=15 // pred_check_branch
          %131 = sbr.rel (%p129) target = $region20
        $region19: #{tpu_custom_call.1} parent=15 // pred_region
          %s132 = sand.u32 %s38, 1
          %s133 = scalar_lea.sflag [#allocation3], %s132
          %s134 = sand.u32 %s38, 1
          %s135 = smul.addr %s134, 32
          %s136 = scalar_lea.vmem [#allocation2], %s135
          %s137 = smul.u32 2, %s22
          %s139 = ssub.s32 512, 512
          %140 = vsyncadd %s133, %s139
          %s141 = smul.addr %s137, 2
          %s142 = smul.addr %s21, 8
          %s143 = sadd.s32 %s141, %s142
          %s144 = smul.addr %s143, 128
          %s145 = scalar_lea.hbm %s0, %s144
          %s146 = sshll.u32 %s136, 4
          %s147 = int_to_ptr.vmem [resolvable:$true] %s146
          %152 = dma.hbm_to_vmem [thread:$0]  %s145, 512, %s147, %s133, 256, 256, 16
        $region20: #{tpu_custom_call.1} parent=15 // pred_fallthru
          _
        // Predicated region
        $region21: #{tpu_custom_call.1} parent=15 // pred_check
          %p153 = pneg %p76
        $region22: #{tpu_custom_call.1} parent=15 // pred_check_branch
          %155 = sbr.rel (%p153) target = $region24
        $region23: #{tpu_custom_call.1} parent=15 // pred_region
          %s156 = smul.u32 2, %s22
          %p157 = scmp.lt.s32.totalorder %s21, 1
          %s158 = scalar_select %p157, %s21, 1
          %p159 = scmp.lt.s32.totalorder %s156, 3
          %s160 = scalar_select %p159, %s156, 3
          %s161 = smul.addr %s158, 4
          %s162 = sadd.s32 %s160, %s161
          %s163 = smul.addr %s162, 8
          %s164 = scalar_lea.vmem %s1, %s163
          %s165 = smul.u32 2, %s22
        $region24: #{tpu_custom_call.1} parent=15 // pred_fallthru
          _
      $region16: #{tpu_custom_call.1} parent=5 // pred_fallthru
        _
      %p166 = scmp.le.s32.totalorder 1, %s14
      %p167 = scmp.lt.s32.totalorder %s14, 5
      %p168 = pnand %p166, %p167
      %p169 = pneg %p168
      // Predicated region
      $region25: #{tpu_custom_call.1} parent=5 // pred_check
        _
      $region26: #{tpu_custom_call.1} parent=5 // pred_check_branch
        %171 = sbr.rel (%p168) target = $region28
      $region27: #{tpu_custom_call.1} parent=5 // pred_region
        %s172 = ssub.s32 %s14, 1
        %s173 = sand.u32 %s41, 1
        %s174 = scalar_lea.sflag [#allocation3], %s173
        %s175 = sand.u32 %s41, 1
        %s176 = smul.addr %s175, 32
        %s177 = scalar_lea.vmem [#allocation2], %s176
        // Predicated region
        $region29: #{tpu_custom_call.1} parent=27 // pred_check
          %p178 = pneg %p54
        $region30: #{tpu_custom_call.1} parent=27 // pred_check_branch
          %180 = sbr.rel (%p178) target = $region32
        $region31: #{tpu_custom_call.1} parent=27 // pred_region
          %181 = dma.done %s174, 512
        $region32: #{tpu_custom_call.1} parent=27 // pred_fallthru
          _
        %s182 = sand.u32 %s41, 1
        %s183 = scalar_lea.sflag [#allocation3], %s182
        %s184 = sand.u32 %s41, 1
        %s185 = smul.addr %s184, 32
        %s186 = scalar_lea.vmem [#allocation2], %s185
        %p187 = pneg %p54
        %p188 = pneg %p51
        %s189 = smul.u32 2, %s24
        %p190 = scmp.lt.s32.totalorder %s23, 1
        %s191 = scalar_select %p190, %s23, 1
        %p192 = scmp.lt.s32.totalorder %s189, 3
        %s193 = scalar_select %p192, %s189, 3
        %s194 = smul.addr %s191, 4
        %s195 = sadd.s32 %s193, %s194
        %s196 = smul.addr %s195, 8
        %s197 = scalar_lea.vmem %s1, %s196
        %p198 = pneg %p82
        %p199 = pneg %p79
        %p200 = pneg %p110
        %p201 = pneg %p107
        %s202 = sand.u32 %s97, 1
        %s203 = scalar_lea.sflag [#allocation4], %s202
        %s204 = sand.u32 %s97, 1
        %s205 = smul.addr %s204, 32
        %s206 = scalar_lea.vmem [#allocation5], %s205
        %s207 = smul.u32 2, %s24
        %s208 = smul.u32 2, %s24
        %p209 = scmp.lt.s32.totalorder %s23, 1
        %s210 = scalar_select %p209, %s23, 1
        %p211 = scmp.lt.s32.totalorder %s208, 3
        %s212 = scalar_select %p211, %s208, 3
        %s213 = smul.addr %s210, 4
        %s214 = sadd.s32 %s212, %s213
        %s215 = smul.addr %s214, 8
        %s216 = scalar_lea.vmem %s1, %s215
        %s217 = smul.u32 2, %s24
        %s218 = smul.u32 2, %s24
        %v219 = vld [vmem:[%s177] sm:$0xff]
        %v220 = vld [vmem:[%s177 + $0x8] sm:$0xff]
        %v221 = vld [vmem:[%s177 + $0x10] sm:$0xff]
        %v222 = vld [vmem:[%s177 + $0x18] sm:$0xff]
        %v223 = vadd.f32 %v219, %v220
        %224 = vadd.xlane.f32.xlu0 %v223
        %v225 = vpop.xlane.xlu0 %224
        %v226 = vadd.f32 %v221, %v222
        %227 = vadd.xlane.f32.xlu0 %v226
        %v228 = vpop.xlane.xlu0 %227
        %v229 = vmul.f32 %v219, %v219
        %v230 = vmul.f32 %v220, %v220
        %v231 = vmul.f32 %v221, %v221
        %v232 = vmul.f32 %v222, %v222
        %v233 = vadd.f32 %v229, %v230
        %234 = vadd.xlane.f32.xlu0 %v233
        %v235 = vpop.xlane.xlu0 %234
        %v236 = vadd.f32 %v231, %v232
        %237 = vadd.xlane.f32.xlu0 %v236
        %v238 = vpop.xlane.xlu0 %237
        %v239 = vmul.f32 %v225, 0.00390625
        %v240 = vmul.f32 %v228, 0.00390625
        %v241 = vmul.f32 %v235, 0.00390625
        %v242 = vmul.f32 %v238, 0.00390625
        %v243 = vmul.f32 %v239, %v239
        %v244 = vmul.f32 %v240, %v240
        %v245 = vsub.f32 %v241, %v243
        %v246 = vsub.f32 %v242, %v244
        %v247 = vmax.f32 %v245, 0.0
        %v248 = vmax.f32 %v246, 0.0
        %v249 = vld [vmem:[%s216] sm:$0xff]
        %v250 = vld [vmem:[%s216 + $0x8] sm:$0xff]
        %v251 = vadd.f32 %v247, 1e-05
        %v252 = vadd.f32 %v248, 1e-05
        %v253 = vrsqrt.pop %v251
        %v254 = vrsqrt.pop %v252
        %v255 = vmul.f32 %v249, %v253
        %v256 = vmul.f32 %v250, %v254
        %v257 = vmul.f32 %v239, %v255
        %v258 = vmul.f32 %v240, %v256
        %261 = vrot.lane.b32.xlu0 %v257, 1
        %v262 = vpop.permute.xlu0 %261
        %263 = vrot.lane.b32.xlu0 %v258, 1
        %v264 = vpop.permute.xlu0 %263
        %v267 = vsub.f32 %v249, %v262
        %v268 = vsub.f32 %v250, %v264
        %270 = vset.pattern.permute.xlu0 0
        %271 = vperm.xlu0 %270, %v255
        %v272 = vpop.permute.xlu0 %271
        %275 = vset.pattern.permute.xlu0 0
        %276 = vperm.xlu0 %275, %v256
        %v277 = vpop.permute.xlu0 %276
        %v279 = vmul.f32 %v219, %v272
        %v280 = vmul.f32 %v220, %v272
        %v281 = vmul.f32 %v221, %v277
        %v282 = vmul.f32 %v222, %v277
        %284 = vset.pattern.permute.xlu0 1
        %285 = vperm.xlu0 %284, %v267
        %v286 = vpop.permute.xlu0 %285
        %289 = vset.pattern.permute.xlu0 1
        %290 = vperm.xlu0 %289, %v268
        %v291 = vpop.permute.xlu0 %290
        %v293 = vadd.f32 %v279, %v286
        %v294 = vadd.f32 %v280, %v286
        %v295 = vadd.f32 %v281, %v291
        %v296 = vadd.f32 %v282, %v291
        %v297 = vmax.f32 %v293, 0.0
        %v298 = vmax.f32 %v294, 0.0
        %v299 = vmax.f32 %v295, 0.0
        %v300 = vmax.f32 %v296, 0.0
        %301 = vst [vmem:[%s206] sm:$0xff] %v297
        %302 = vst [vmem:[%s206 + $0x8] sm:$0xff] %v298
        %303 = vst [vmem:[%s206 + $0x10] sm:$0xff] %v299
        %304 = vst [vmem:[%s206 + $0x18] sm:$0xff] %v300
        %s305 = sand.u32 %s97, 1
        %s306 = scalar_lea.sflag [#allocation4], %s305
        %s307 = sand.u32 %s97, 1
        %s308 = smul.addr %s307, 32
        %s309 = scalar_lea.vmem [#allocation5], %s308
        // Predicated region
        $region33: #{tpu_custom_call.1} parent=27 // pred_check
          %p310 = pneg %p107
        $region34: #{tpu_custom_call.1} parent=27 // pred_check_branch
          %312 = sbr.rel (%p310) target = $region36
        $region35: #{tpu_custom_call.1} parent=27 // pred_region
          %s313 = smul.u32 2, %s24
          %s315 = ssub.s32 512, 512
          %316 = vsyncadd %s306, %s315
          %s317 = smul.addr %s313, 2
          %s318 = smul.addr %s23, 8
          %s319 = sadd.s32 %s317, %s318
          %s320 = smul.addr %s319, 128
          %s321 = scalar_lea.hbm %s2, %s320
          %s322 = sshll.u32 %s309, 4
          %s323 = int_to_ptr.vmem [resolvable:$true] %s322
          %328 = dma.vmem_to_hbm [thread:$0]  %s323, 512, %s321, %s306, 256, 256, 16
        $region36: #{tpu_custom_call.1} parent=27 // pred_fallthru
          _
      $region28: #{tpu_custom_call.1} parent=5 // pred_fallthru
        _
      %p329 = scmp.le.s32.totalorder 2, %s14
      // Predicated region
      $region37: #{tpu_custom_call.1} parent=5 // pred_check
        %p330 = pneg %p329
      $region38: #{tpu_custom_call.1} parent=5 // pred_check_branch
        %332 = sbr.rel (%p330) target = $region40
      $region39: #{tpu_custom_call.1} parent=5 // pred_region
        %s333 = ssub.s32 %s14, 2
        // Predicated region
        $region41: #{tpu_custom_call.1} parent=39 // pred_check
          %p334 = pneg %p113
        $region42: #{tpu_custom_call.1} parent=39 // pred_check_branch
          %336 = sbr.rel (%p334) target = $region44
        $region43: #{tpu_custom_call.1} parent=39 // pred_region
          %s337 = sand.u32 %s98, 1
          %s338 = scalar_lea.sflag [#allocation4], %s337
          %s339 = sand.u32 %s98, 1
          %s340 = smul.addr %s339, 32
          %s341 = scalar_lea.vmem [#allocation5], %s340
          %342 = dma.done %s338, 512
        $region44: #{tpu_custom_call.1} parent=39 // pred_fallthru
          _
      $region40: #{tpu_custom_call.1} parent=5 // pred_fallthru
        _
    $region6: #{tpu_custom_call.1} parent=1 // loop_footer
      %s18 = sadd.s32 1, %s14
    $region7: #{tpu_custom_call.1} parent=1 // loop_footer_branch
      %13 = sbr.rel target = $region3
    $region8: #{tpu_custom_call.1} parent=1 // loop_exit
      _
    %343 = vsyncpa [#allocation3], 1
    %s344 = scalar_lea.sflag [#allocation3], 1
    %345 = vsyncpa %s344, 1
    %346 = vsyncpa [#allocation4], 1
    %s347 = scalar_lea.sflag [#allocation4], 1
    %348 = vsyncpa %s347, 1

</llo_original>
